<compile_context>
chip_gen: v5e
topology: v5e:2x2
jax: 0.10.0
libtpu: 0.0.40
codegen_flags: <defaults>
</compile_context>

<pallas_src>
import functools
import math

import jax
import jax.numpy as jnp
from jax import lax
from jax.experimental import pallas as pl
from jax.experimental.pallas import tpu as pltpu


def _fastformer_kernel(x_ref, wproj_ref, wka_ref, wobd_ref, o_ref, *,
                       num_heads, head_dim, out_features):
    F = out_features
    H = num_heads
    d = head_dim
    Bt, S, Fin = x_ref.shape

    x2 = x_ref[...].reshape(Bt * S, Fin)                       # (Bt*S, Fin) bf16

    # Fused projection: [ q | k | qa/scale | 0-pad ] in one wide bf16 MXU matmul.
    proj = jnp.dot(x2, wproj_ref[...],
                   preferred_element_type=jnp.float32)         # (Bt*S, Wp_pad) f32
    q_f32 = proj[:, :F]                                        # f32, kept for residual
    q_bf = q_f32.astype(jnp.bfloat16)                          # cast once, reused
    k_bf = proj[:, F:2 * F].astype(jnp.bfloat16)
    qa = proj[:, 2 * F:2 * F + H]                              # (Bt*S, H), already / sqrt(d)

    q3 = q_bf.reshape(Bt, S, F)
    k3 = k_bf.reshape(Bt, S, F)

    # Head-selection mask built in-kernel: mask[h, c] = 1 iff c in [h*d, (h+1)*d).
    rows = lax.broadcasted_iota(jnp.int32, (H, F), 0)
    cols = lax.broadcasted_iota(jnp.int32, (H, F), 1)
    lo = rows * d
    head_mask = jnp.logical_and(cols >= lo, cols < lo + d).astype(jnp.float32)

    # ---- query additive attention (per batch row, over the sequence axis) ----
    eq = jnp.exp(qa.reshape(Bt, S, H))                                   # (Bt, S, H)
    inv_q = pl.reciprocal(jnp.sum(eq, axis=1, keepdims=True) + 1e-8,
                          approx=True)
    wq_attn = (eq * inv_q).astype(jnp.bfloat16)                          # (Bt, S, H)

    # Per-head query context via an MXU contraction over S (small (S,H) operand
    # is the one that gets transposed), then block-mask + sum over H.
    gq = jnp.einsum('bsh,bsf->bhf', wq_attn, q3,
                    preferred_element_type=jnp.float32)                  # (Bt, H, F)
    q_ctx = jnp.sum(gq * head_mask[None], axis=1, keepdims=True)         # (Bt, 1, F)

    # ---- query-key interaction + key additive attention ----
    qk = k3 * q_ctx.astype(jnp.bfloat16)                                 # (Bt, S, F) bf16
    ka = jnp.dot(qk.reshape(Bt * S, F), wka_ref[...],
                 preferred_element_type=jnp.float32)                     # (Bt*S, H)
    ek = jnp.exp(ka.reshape(Bt, S, H))
    inv_k = pl.reciprocal(jnp.sum(ek, axis=1, keepdims=True) + 1e-8,
                          approx=True)
    wk_attn = (ek * inv_k).astype(jnp.bfloat16)                          # (Bt, S, H)

    gk = jnp.einsum('bsh,bsf->bhf', wk_attn, qk,
                    preferred_element_type=jnp.float32)                  # (Bt, H, F)
    k_ctx = jnp.sum(gk * head_mask[None], axis=1, keepdims=True)         # (Bt, 1, F)

    # ---- key-value interaction + block-diagonal output transform ----
    kv = (q3 * k_ctx.astype(jnp.bfloat16)).reshape(Bt * S, F)            # bf16
    kv_t = jnp.dot(kv, wobd_ref[...],
                   preferred_element_type=jnp.float32)                   # (Bt*S, F)

    # Residual: value (= query) + transformed key_value; one lane-dense store.
    out = q_f32 + kv_t
    o_ref[...] = out.reshape(Bt, S, F).astype(o_ref.dtype)


def _pick_batch_tile(batch, seq_len, target_rows=256):
    """Largest divisor of `batch` such that bt*seq_len stays near target_rows."""
    bt = max(1, min(batch, target_rows // max(seq_len, 1)))
    while batch % bt:
        bt -= 1
    return max(bt, 1)


def _vmem_capacity_bytes():
    try:
        return int(pltpu.get_tpu_info().vmem_capacity_bytes)
    except Exception:  # older jax without get_tpu_info; assume v7x (smallest)
        return 64 * 2**20


def fastformer_forward(x, w_query, w_key, w_query_align, w_key_align, w_output,
                       num_heads):
    """x: (B, S, Fin); weights in PyTorch (out, in) convention. Returns (B, S, Fout)."""
    B, S, Fin = x.shape
    Fout = w_query.shape[0]
    H = num_heads
    d = Fout // H
    scale = math.sqrt(d)
    out_dtype = x.dtype

    f32 = jnp.float32
    bf16 = jnp.bfloat16

    # ---- host-side weight prep ----
    wq_t = w_query.T.astype(f32)                                   # (Fin, Fout)
    wk_t = w_key.T.astype(f32)                                     # (Fin, Fout)
    # Fold query_align through the query projection, pre-scale by 1/sqrt(d):
    #   qa = (x @ Wq^T) @ Wqa^T / scale = x @ (Wq^T @ Wqa^T / scale)
    wqa_fused = (wq_t @ w_query_align.T.astype(f32)) / scale       # (Fin, H)
    Wp = 2 * Fout + H
    Wp_pad = ((Wp + 127) // 128) * 128                             # lane-align
    pieces = [wq_t, wk_t, wqa_fused]
    if Wp_pad > Wp:
        pieces.append(jnp.zeros((Fin, Wp_pad - Wp), f32))
    w_proj = jnp.concatenate(pieces, axis=1).astype(bf16)          # (Fin, Wp_pad)

    wka_t = (w_key_align.T.astype(f32) / scale).astype(bf16)       # (Fout, H)
    # Block-diagonal kron(I_H, Wo^T): one (F,F) matmul instead of H (d,d) dots.
    w_out_bd = jnp.kron(jnp.eye(H, dtype=f32),
                        w_output.T.astype(f32)).astype(bf16)       # (Fout, Fout)

    x_bf = x.astype(bf16)                                          # halve x DMA bytes

    # ---- grid / tiling ----
    Bt = _pick_batch_tile(B, S)
    grid = (B // Bt,)

    kernel = functools.partial(_fastformer_kernel, num_heads=H, head_dim=d,
                               out_features=Fout)

    # ---- VMEM budget (no double hedge): weights + double-buffered I/O blocks
    # + a generous allowance for in-kernel (Bt*S, F)-scale temporaries, capped
    # at 85% of this generation's physical VMEM. ----
    out_itemsize = jnp.dtype(out_dtype).itemsize
    weight_bytes = (Fin * Wp_pad + Fout * H + Fout * Fout) * 2
    io_bytes = 2 * (Bt * S * Fin * 2 + Bt * S * Fout * out_itemsize)
    tmp_bytes = 16 * Bt * S * Fout * 4
    est = 2 * weight_bytes + io_bytes + tmp_bytes
    cap = _vmem_capacity_bytes()
    vmem_limit = int(min(int(0.85 * cap), max(est + est // 4, 32 * 2**20)))

    # ---- advisory cost estimate for the XLA scheduler ----
    flops = 2 * B * S * (Fin * Wp_pad + Fout * H + 2 * H * Fout + Fout * Fout)
    transcendentals = 2 * B * S * H
    bytes_accessed = (B * S * Fin * 2 + B * S * Fout * out_itemsize
                      + weight_bytes)

    return pl.pallas_call(
        kernel,
        out_shape=jax.ShapeDtypeStruct((B, S, Fout), out_dtype),
        grid=grid,
        in_specs=[
            pl.BlockSpec((Bt, S, Fin), lambda b: (b, 0, 0)),
            pl.BlockSpec((Fin, Wp_pad), lambda b: (0, 0)),
            pl.BlockSpec((Fout, H), lambda b: (0, 0)),
            pl.BlockSpec((Fout, Fout), lambda b: (0, 0)),
        ],
        out_specs=pl.BlockSpec((Bt, S, Fout), lambda b: (b, 0, 0)),
        compiler_params=pltpu.CompilerParams(
            dimension_semantics=("parallel",),
            vmem_limit_bytes=vmem_limit),
        cost_estimate=pl.CostEstimate(flops=flops,
                                      transcendentals=transcendentals,
                                      bytes_accessed=bytes_accessed),
    )(x_bf, w_proj, wka_t, w_out_bd)


def fastformer_reference(x, w_query, w_key, w_query_align, w_key_align,
                         w_output, num_heads):
    """Pure-JAX (f32) transcription of the PyTorch forward (attn_mask=None)."""
    B, S, Fin = x.shape
    Fout = w_query.shape[0]
    d = Fout // num_heads
    scale = math.sqrt(d)

    def split_heads(t):  # (B,S,Fout) -> (B,H,S,d)
        return t.reshape(B, S, num_heads, d).transpose(0, 2, 1, 3)

    def merge_heads(t):  # (B,H,S,d) -> (B,S,Fout)
        return t.transpose(0, 2, 1, 3).reshape(B, S, Fout)

    query = x @ w_query.T
    key = x @ w_key.T
    value = query
    query_heads = split_heads(query)
    key_heads = split_heads(key)
    value_heads = query_heads

    qas = (query @ w_query_align.T).transpose(0, 2, 1) / scale      # (B,H,S)
    eq = jnp.exp(qas)
    qw = eq / (jnp.sum(eq, axis=2, keepdims=True) + 1e-8)           # (B,H,S)
    q_ctx = jnp.sum(query_heads * qw[..., None], axis=2, keepdims=True)

    qk_heads = key_heads * q_ctx
    qk = merge_heads(qk_heads)

    kas = (qk @ w_key_align.T).transpose(0, 2, 1) / scale
    ek = jnp.exp(kas)
    kw = ek / (jnp.sum(ek, axis=2, keepdims=True) + 1e-8)
    k_ctx = jnp.sum(qk_heads * kw[..., None], axis=2, keepdims=True)

    kv_heads = value_heads * k_ctx
    kv_heads = kv_heads @ w_output.T
    kv = merge_heads(kv_heads)
    return value + kv


if __name__ == "__main__":
    B, S = 2, 8
    in_features, out_features, num_heads = 16, 128, 4
    head_features = out_features // num_heads

    key = jax.random.PRNGKey(0)
    kx, k1, k2, k3, k4, k5 = jax.random.split(key, 6)
    x = jax.random.normal(kx, (B, S, in_features), dtype=jnp.float32)

    def init_linear(k, out_f, in_f):
        bound = 1.0 / math.sqrt(in_f)
        return jax.random.uniform(k, (out_f, in_f), jnp.float32, -bound, bound)

    w_query = init_linear(k1, out_features, in_features)
    w_key = init_linear(k2, out_features, in_features)
    w_query_align = init_linear(k3, num_heads, out_features)
    w_key_align = init_linear(k4, num_heads, out_features)
    w_output = init_linear(k5, head_features, head_features)

    out = fastformer_forward(x, w_query, w_key, w_query_align, w_key_align,
                             w_output, num_heads)
    out = jax.block_until_ready(out)

    ref = fastformer_reference(x, w_query, w_key, w_query_align, w_key_align,
                               w_output, num_heads)
    assert out.shape == (B, S, out_features)
    max_err = float(jnp.max(jnp.abs(out - ref)))
    # bf16 MXU operands (f32 accumulation) vs. a pure-f32 reference.
    assert jnp.allclose(out, ref, atol=5e-2, rtol=5e-2), (
        f"mismatch vs reference (max abs err {max_err})")

    print("KERNEL_OK")
</pallas_src>

<mosaic_0001>
module attributes {stable_mosaic.version = 11 : i64} {
  func.func @_fastformer_kernel(%arg0: i32, %arg1: memref<2x8x16xbf16, #tpu.memory_space<vmem>>, %arg2: memref<16x384xbf16, #tpu.memory_space<vmem>>, %arg3: memref<128x4xbf16, #tpu.memory_space<vmem>>, %arg4: memref<128x128xbf16, #tpu.memory_space<vmem>>, %arg5: memref<2x8x128xf32, #tpu.memory_space<vmem>>) attributes {dimension_semantics = [#tpu.dimension_semantics<parallel>], iteration_bounds = array<i64: 1>, scalar_prefetch = 0 : i64, scratch_operands = 0 : i64, tpu.core_type = #tpu.core_type<tc>, window_params = [{transform_indices = @transform_0, window_bounds = array<i64: 2, 8, 16>}, {pipeline_mode = #tpu.pipeline_mode<synchronous>, transform_indices = @transform_1, window_bounds = array<i64: 16, 384>}, {pipeline_mode = #tpu.pipeline_mode<synchronous>, transform_indices = @transform_2, window_bounds = array<i64: 128, 4>}, {pipeline_mode = #tpu.pipeline_mode<synchronous>, transform_indices = @transform_3, window_bounds = array<i64: 128, 128>}, {transform_indices = @transform_4, window_bounds = array<i64: 2, 8, 128>}]} {
    %c0 = arith.constant 0 : index
    %c0_0 = arith.constant 0 : index
    %c0_1 = arith.constant 0 : index
    %0 = vector.load %arg1[%c0, %c0_0, %c0_1] : memref<2x8x16xbf16, #tpu.memory_space<vmem>>, vector<2x8x16xbf16>
    %1 = vector.shape_cast %0 : vector<2x8x16xbf16> to vector<16x16xbf16>
    %c0_2 = arith.constant 0 : index
    %c0_3 = arith.constant 0 : index
    %2 = vector.load %arg2[%c0_2, %c0_3] : memref<16x384xbf16, #tpu.memory_space<vmem>>, vector<16x384xbf16>
    %cst = arith.constant dense<0.000000e+00> : vector<16x384xf32>
    %3 = tpu.matmul %1, %2, %cst {dimension_numbers = #tpu.dot_dimension_numbers<[1], [0], [0], [1], [0, 0, 1, 1], [], []>} : vector<16x16xbf16>, vector<16x384xbf16>, vector<16x384xf32> -> vector<16x384xf32>
    %4 = vector.extract_strided_slice %3 {offsets = [0, 0], sizes = [16, 128], strides = [1, 1]} : vector<16x384xf32> to vector<16x128xf32>
    %5 = arith.truncf %4 : vector<16x128xf32> to vector<16x128xbf16>
    %6 = vector.extract_strided_slice %3 {offsets = [0, 128], sizes = [16, 128], strides = [1, 1]} : vector<16x384xf32> to vector<16x128xf32>
    %7 = arith.truncf %6 : vector<16x128xf32> to vector<16x128xbf16>
    %8 = vector.extract_strided_slice %3 {offsets = [0, 256], sizes = [16, 4], strides = [1, 1]} : vector<16x384xf32> to vector<16x4xf32>
    %9 = vector.shape_cast %5 : vector<16x128xbf16> to vector<2x8x128xbf16>
    %10 = vector.shape_cast %7 : vector<16x128xbf16> to vector<2x8x128xbf16>
    %11 = tpu.iota {dimensions = array<i32: 0>} : vector<4x128xi32>
    %12 = tpu.iota {dimensions = array<i32: 1>} : vector<4x128xi32>
    %c32_i32 = arith.constant 32 : i32
    %13 = vector.broadcast %c32_i32 : i32 to vector<4x128xi32>
    %14 = arith.muli %11, %13 : vector<4x128xi32>
    %15 = arith.cmpi sge, %12, %14 : vector<4x128xi32>
    %c32_i32_4 = arith.constant 32 : i32
    %16 = vector.broadcast %c32_i32_4 : i32 to vector<4x128xi32>
    %17 = arith.addi %14, %16 : vector<4x128xi32>
    %18 = arith.cmpi slt, %12, %17 : vector<4x128xi32>
    %19 = arith.andi %15, %18 : vector<4x128xi1>
    %20 = arith.extui %19 : vector<4x128xi1> to vector<4x128xi32>
    %21 = arith.sitofp %20 : vector<4x128xi32> to vector<4x128xf32>
    %22 = vector.shape_cast %8 : vector<16x4xf32> to vector<2x8x4xf32>
    %23 = math.exp %22 : vector<2x8x4xf32>
    %cst_5 = arith.constant dense<0.000000e+00> : vector<2x4xf32>
    %24 = vector.multi_reduction <add>, %23, %cst_5 [1] : vector<2x8x4xf32> to vector<2x4xf32>
    %25 = vector.shape_cast %24 : vector<2x4xf32> to vector<2x1x4xf32>
    %cst_6 = arith.constant 9.99999993E-9 : f32
    %26 = vector.broadcast %cst_6 : f32 to vector<2x1x4xf32>
    %27 = arith.addf %25, %26 : vector<2x1x4xf32>
    %28 = tpu.reciprocal %27 {approx = true} : vector<2x1x4xf32> -> vector<2x1x4xf32>
    %29 = vector.broadcast %28 : vector<2x1x4xf32> to vector<2x8x4xf32>
    %30 = arith.mulf %23, %29 : vector<2x8x4xf32>
    %31 = arith.truncf %30 : vector<2x8x4xf32> to vector<2x8x4xbf16>
    "tpu.trace_start"() <{level = 10 : i32, message = "bsh,bsf->bhf"}> : () -> ()
    %cst_7 = arith.constant dense<0.000000e+00> : vector<2x4x128xf32>
    %32 = tpu.matmul %31, %9, %cst_7 {dimension_numbers = #tpu.dot_dimension_numbers<[1], [1], [2], [2], [0, 0, 0, 2, 1, 2], [0], [0]>} : vector<2x8x4xbf16>, vector<2x8x128xbf16>, vector<2x4x128xf32> -> vector<2x4x128xf32>
    "tpu.trace_stop"() : () -> ()
    %33 = vector.shape_cast %21 : vector<4x128xf32> to vector<1x4x128xf32>
    %34 = vector.broadcast %33 : vector<1x4x128xf32> to vector<2x4x128xf32>
    %35 = arith.mulf %32, %34 : vector<2x4x128xf32>
    %cst_8 = arith.constant dense<0.000000e+00> : vector<2x128xf32>
    %36 = vector.multi_reduction <add>, %35, %cst_8 [1] : vector<2x4x128xf32> to vector<2x128xf32>
    %37 = vector.shape_cast %36 : vector<2x128xf32> to vector<2x1x128xf32>
    %38 = arith.truncf %37 : vector<2x1x128xf32> to vector<2x1x128xbf16>
    %39 = vector.broadcast %38 : vector<2x1x128xbf16> to vector<2x8x128xbf16>
    %40 = arith.mulf %10, %39 : vector<2x8x128xbf16>
    %41 = vector.shape_cast %40 : vector<2x8x128xbf16> to vector<16x128xbf16>
    %c0_9 = arith.constant 0 : index
    %c0_10 = arith.constant 0 : index
    %42 = vector.load %arg3[%c0_9, %c0_10] : memref<128x4xbf16, #tpu.memory_space<vmem>>, vector<128x4xbf16>
    %cst_11 = arith.constant dense<0.000000e+00> : vector<16x4xf32>
    %43 = tpu.matmul %41, %42, %cst_11 {dimension_numbers = #tpu.dot_dimension_numbers<[1], [0], [0], [1], [0, 0, 1, 1], [], []>} : vector<16x128xbf16>, vector<128x4xbf16>, vector<16x4xf32> -> vector<16x4xf32>
    %44 = vector.shape_cast %43 : vector<16x4xf32> to vector<2x8x4xf32>
    %45 = math.exp %44 : vector<2x8x4xf32>
    %cst_12 = arith.constant dense<0.000000e+00> : vector<2x4xf32>
    %46 = vector.multi_reduction <add>, %45, %cst_12 [1] : vector<2x8x4xf32> to vector<2x4xf32>
    %47 = vector.shape_cast %46 : vector<2x4xf32> to vector<2x1x4xf32>
    %cst_13 = arith.constant 9.99999993E-9 : f32
    %48 = vector.broadcast %cst_13 : f32 to vector<2x1x4xf32>
    %49 = arith.addf %47, %48 : vector<2x1x4xf32>
    %50 = tpu.reciprocal %49 {approx = true} : vector<2x1x4xf32> -> vector<2x1x4xf32>
    %51 = vector.broadcast %50 : vector<2x1x4xf32> to vector<2x8x4xf32>
    %52 = arith.mulf %45, %51 : vector<2x8x4xf32>
    %53 = arith.truncf %52 : vector<2x8x4xf32> to vector<2x8x4xbf16>
    "tpu.trace_start"() <{level = 10 : i32, message = "bsh,bsf->bhf"}> : () -> ()
    %cst_14 = arith.constant dense<0.000000e+00> : vector<2x4x128xf32>
    %54 = tpu.matmul %53, %40, %cst_14 {dimension_numbers = #tpu.dot_dimension_numbers<[1], [1], [2], [2], [0, 0, 0, 2, 1, 2], [0], [0]>} : vector<2x8x4xbf16>, vector<2x8x128xbf16>, vector<2x4x128xf32> -> vector<2x4x128xf32>
    "tpu.trace_stop"() : () -> ()
    %55 = vector.shape_cast %21 : vector<4x128xf32> to vector<1x4x128xf32>
    %56 = vector.broadcast %55 : vector<1x4x128xf32> to vector<2x4x128xf32>
    %57 = arith.mulf %54, %56 : vector<2x4x128xf32>
    %cst_15 = arith.constant dense<0.000000e+00> : vector<2x128xf32>
    %58 = vector.multi_reduction <add>, %57, %cst_15 [1] : vector<2x4x128xf32> to vector<2x128xf32>
    %59 = vector.shape_cast %58 : vector<2x128xf32> to vector<2x1x128xf32>
    %60 = arith.truncf %59 : vector<2x1x128xf32> to vector<2x1x128xbf16>
    %61 = vector.broadcast %60 : vector<2x1x128xbf16> to vector<2x8x128xbf16>
    %62 = arith.mulf %9, %61 : vector<2x8x128xbf16>
    %63 = vector.shape_cast %62 : vector<2x8x128xbf16> to vector<16x128xbf16>
    %c0_16 = arith.constant 0 : index
    %c0_17 = arith.constant 0 : index
    %64 = vector.load %arg4[%c0_16, %c0_17] : memref<128x128xbf16, #tpu.memory_space<vmem>>, vector<128x128xbf16>
    %cst_18 = arith.constant dense<0.000000e+00> : vector<16x128xf32>
    %65 = tpu.matmul %63, %64, %cst_18 {dimension_numbers = #tpu.dot_dimension_numbers<[1], [0], [0], [1], [0, 0, 1, 1], [], []>} : vector<16x128xbf16>, vector<128x128xbf16>, vector<16x128xf32> -> vector<16x128xf32>
    %66 = arith.addf %4, %65 : vector<16x128xf32>
    %67 = vector.shape_cast %66 : vector<16x128xf32> to vector<2x8x128xf32>
    %c0_19 = arith.constant 0 : index
    %c0_20 = arith.constant 0 : index
    %c0_21 = arith.constant 0 : index
    %68 = vector.load %arg5[%c0_19, %c0_20, %c0_21] : memref<2x8x128xf32, #tpu.memory_space<vmem>>, vector<2x8x128xf32>
    tpu.vector_store %arg5[%c0_19, %c0_20, %c0_21], %67 {strides = array<i32>} : memref<2x8x128xf32, #tpu.memory_space<vmem>>, vector<2x8x128xf32>,
    return
  }
  func.func @transform_0(%arg0: i32) -> (i32, i32, i32) {
    %c0_i32 = arith.constant 0 : i32
    %c0_i32_0 = arith.constant 0 : i32
    %c0_i32_1 = arith.constant 0 : i32
    return %arg0, %c0_i32, %c0_i32_0 : i32, i32, i32
  }
  func.func @transform_1(%arg0: i32) -> (i32, i32) {
    %c0_i32 = arith.constant 0 : i32
    %c0_i32_0 = arith.constant 0 : i32
    %c0_i32_1 = arith.constant 0 : i32
    return %c0_i32, %c0_i32_0 : i32, i32
  }
  func.func @transform_2(%arg0: i32) -> (i32, i32) {
    %c0_i32 = arith.constant 0 : i32
    %c0_i32_0 = arith.constant 0 : i32
    %c0_i32_1 = arith.constant 0 : i32
    return %c0_i32, %c0_i32_0 : i32, i32
  }
  func.func @transform_3(%arg0: i32) -> (i32, i32) {
    %c0_i32 = arith.constant 0 : i32
    %c0_i32_0 = arith.constant 0 : i32
    %c0_i32_1 = arith.constant 0 : i32
    return %c0_i32, %c0_i32_0 : i32, i32
  }
  func.func @transform_4(%arg0: i32) -> (i32, i32, i32) {
    %c0_i32 = arith.constant 0 : i32
    %c0_i32_0 = arith.constant 0 : i32
    %c0_i32_1 = arith.constant 0 : i32
    return %arg0, %c0_i32, %c0_i32_0 : i32, i32, i32
  }
}

</mosaic_0001>

<llo_original>
// kernel: tpu_custom_call.1
$region0: #{tpu_custom_call.1}
  #allocation0 [shape = 'u32[]', space=smem, size = 0x4, offset = 0x4, fixed_abs, tag = 'smem constant byte address 0x4 - core index']
  #allocation1 [shape = 'u32[72,128]{1,0:T(1,128)}', space=vmem, size = 0x9000, scoped, tag = 'internal scratch']
  %s0 = inlined_call_operand.hbm [shape: bf16[2,8,16], index: 0, kind: input, shape index: {}]
  %s1 = inlined_call_operand.hbm [shape: bf16[16,384], index: 1, kind: input, shape index: {}]
  %s2 = inlined_call_operand.vmem [shape: bf16[128,4], index: 2, kind: input, shape index: {}]
  %s3 = inlined_call_operand.vmem [shape: bf16[128,128], index: 3, kind: input, shape index: {}]
  %s4 = inlined_call_operand.hbm [shape: f32[2,8,128], index: 4, kind: output, shape index: {}]
  %s5 = sld [smem:[#allocation0]]
  $region34: #{tpu_custom_call.1} parent=0
    _
  %s7 = ssub.s32 1, %s5
  %s8 = scalar_select 0, %s7, %s5
  $region1: #{tpu_custom_call.1} parent=0
    #allocation2 [shape = 'u8[4096]{0}', space=vmem, size = 0x1000, scoped, tag = 'input window, operand 0, single buffered']
    #allocation3 [shape = 's32[1]{0}', space=sflag, size = 0x4, scoped, tag = 'scoped memory for tpu_custom_call.1']
    #allocation4 [shape = 's32[1]{0}', space=sflag, size = 0x4, scoped, tag = 'scoped memory for tpu_custom_call.1']
    #allocation5 [shape = 'u8[12288]{0}', space=vmem, size = 0x3000, scoped, tag = 'input window, operand 1, single buffered']
    #allocation6 [shape = 's32[1]{0}', space=sflag, size = 0x4, scoped, tag = 'scoped memory for tpu_custom_call.1']
    #allocation7 [shape = 'u8[8192]{0}', space=vmem, size = 0x2000, scoped, tag = 'output window, operand 0, single buffered']
    %9 = vsyncpa [#allocation3], 0
    %10 = vsyncpa [#allocation6], 0
    %11 = vsyncpa [#allocation4], 0
    // Predicated region
    $region2: #{tpu_custom_call.1} parent=1 // pred_check
      _
    $region3: #{tpu_custom_call.1} parent=1 // pred_check_branch
      %13 = sbr.rel (0) target = $region5
    $region4: #{tpu_custom_call.1} parent=1 // pred_region
      %15 = vsyncadd [#allocation3], 0
      %s16 = sshll.u32 %s0, 4
      %s17 = int_to_ptr.hbm [resolvable:$true] %s16
      %s18 = sshll.u32 [#allocation2], 4
      %s19 = int_to_ptr.vmem [resolvable:$true] %s18
      %24 = dma.hbm_to_vmem [thread:$0]  %s17, 128, %s19, [#allocation3], 64, 64, 4
    $region5: #{tpu_custom_call.1} parent=1 // pred_fallthru
      _
    // Predicated region
    $region6: #{tpu_custom_call.1} parent=1 // pred_check
      _
    $region7: #{tpu_custom_call.1} parent=1 // pred_check_branch
      %26 = sbr.rel (0) target = $region9
    $region8: #{tpu_custom_call.1} parent=1 // pred_region
      %28 = vsyncadd [#allocation6], 0
      %s29 = sshll.u32 %s1, 4
      %s30 = int_to_ptr.hbm [resolvable:$true] %s29
      %s31 = sshll.u32 [#allocation5], 4
      %s32 = int_to_ptr.vmem [resolvable:$true] %s31
      %37 = dma.hbm_to_vmem [thread:$0]  %s30, 384, %s32, [#allocation6], 192, 192, 12
    $region9: #{tpu_custom_call.1} parent=1 // pred_fallthru
      _
    // Predicated region
    $region10: #{tpu_custom_call.1} parent=1 // pred_check
      _
    $region11: #{tpu_custom_call.1} parent=1 // pred_check_branch
      %39 = sbr.rel (0) target = $region13
    $region12: #{tpu_custom_call.1} parent=1 // pred_region
      _
    $region13: #{tpu_custom_call.1} parent=1 // pred_fallthru
      _
    // Predicated region
    $region14: #{tpu_custom_call.1} parent=1 // pred_check
      _
    $region15: #{tpu_custom_call.1} parent=1 // pred_check_branch
      %41 = sbr.rel (0) target = $region17
    $region16: #{tpu_custom_call.1} parent=1 // pred_region
      _
    $region17: #{tpu_custom_call.1} parent=1 // pred_fallthru
      _
    // Predicated region
    $region18: #{tpu_custom_call.1} parent=1 // pred_check
      _
    $region19: #{tpu_custom_call.1} parent=1 // pred_check_branch
      %43 = sbr.rel (0) target = $region21
    $region20: #{tpu_custom_call.1} parent=1 // pred_region
      %45 = dma.done [#allocation3], 128
    $region21: #{tpu_custom_call.1} parent=1 // pred_fallthru
      _
    // Predicated region
    $region22: #{tpu_custom_call.1} parent=1 // pred_check
      _
    $region23: #{tpu_custom_call.1} parent=1 // pred_check_branch
      %47 = sbr.rel (0) target = $region25
    $region24: #{tpu_custom_call.1} parent=1 // pred_region
      %49 = dma.done [#allocation6], 384
    $region25: #{tpu_custom_call.1} parent=1 // pred_fallthru
      _
    %v51 = vld [vmem:[#allocation2] sm:$0xf]
    %v52 = vld [vmem:[#allocation2 + $0x4] sm:$0xf]
    %v53 = vld [vmem:[#allocation5] sm:$0xff]
    %v54 = vld [vmem:[#allocation5 + $0x8] sm:$0xf]
    %v55 = vld [vmem:[#allocation5 + $0xc] sm:$0xff]
    %v56 = vld [vmem:[#allocation5 + $0x14] sm:$0xf]
    %v59 = vunpack.c.l.b16 %v51
    %v60 = vunpack.c.l.b16 %v52
    %v61 = vpack.c.b16 %v60, %v59
    %v66 = vunpack.c.l.b16 %v53
    %v67 = vunpack.c.h.b16 %v53
    %v68 = vunpack.c.l.b16 %v54
    %v69 = vunpack.c.l.b16 %v55
    %v70 = vunpack.c.h.b16 %v55
    %v71 = vunpack.c.l.b16 %v56
    %v72 = vpack.c.b16 %v69, %v66
    %v73 = vpack.c.b16 %v70, %v67
    %v74 = vpack.c.b16 %v71, %v68
    %vm78 = vcmask 130048
    %v80 = vsel %vm78, %v61, 0
    %82 = vmatpush.bf16.msra.mxu0 0
    %83 = vmatpush.bf16.msra.mxu0 0
    %84 = vmatpush.bf16.msra.mxu0 0
    %85 = vmatpush.bf16.msra.mxu0 0
    %86 = vmatpush.bf16.msra.mxu0 0
    %87 = vmatpush.bf16.msra.mxu0 0
    %88 = vmatpush.bf16.msra.mxu0 0
    %89 = vmatpush.bf16.msra.mxu0 %v72
    %90 = vmatmul.bf16.gmra.mxu0 %v80
    %v91 = vpop.f32.mrf.mxu0
    %v92 = vadd.f32 0.0, %v91
    %v93 = vpop.f32.mrf.mxu0
    %v94 = vadd.f32 0.0, %v93
    %95 = vdwg.mxu0
    %96 = vmatpush.bf16.msra.mxu0 0
    %97 = vmatpush.bf16.msra.mxu0 0
    %98 = vmatpush.bf16.msra.mxu0 0
    %99 = vmatpush.bf16.msra.mxu0 0
    %100 = vmatpush.bf16.msra.mxu0 0
    %101 = vmatpush.bf16.msra.mxu0 0
    %102 = vmatpush.bf16.msra.mxu0 0
    %103 = vmatpush.bf16.msra.mxu0 %v73
    %104 = vmatmul.bf16.gmra.mxu0 %v80
    %v105 = vpop.f32.mrf.mxu0
    %v106 = vadd.f32 0.0, %v105
    %v107 = vpop.f32.mrf.mxu0
    %v108 = vadd.f32 0.0, %v107
    %109 = vdwg.mxu0
    %110 = vmatpush.bf16.msra.mxu0 0
    %111 = vmatpush.bf16.msra.mxu0 0
    %112 = vmatpush.bf16.msra.mxu0 0
    %113 = vmatpush.bf16.msra.mxu0 0
    %114 = vmatpush.bf16.msra.mxu0 0
    %115 = vmatpush.bf16.msra.mxu0 0
    %116 = vmatpush.bf16.msra.mxu0 0
    %117 = vmatpush.bf16.msra.mxu0 %v74
    %118 = vmatmul.bf16.gmra.mxu0 %v80
    %v119 = vpop.f32.mrf.mxu0
    %v120 = vadd.f32 0.0, %v119
    %v121 = vpop.f32.mrf.mxu0
    %v122 = vadd.f32 0.0, %v121
    %123 = vdwg.mxu0
    %v124 = vpack.c.bf16 %v92, %v92
    %v125 = vpack.c.bf16 %v94, %v94
    %v126 = vpack.c.bf16 %v106, %v106
    %v127 = vpack.c.bf16 %v108, %v108
    %v128 = vlaneseq
    %v129 = vshrl.u32 %v128, 7
    %v130 = vlaneseq
    %v131 = vand.u32 %v130, 127
    %v132 = vmul.u32 %v129, 32
    %vm133 = vcmp.ge.s32.totalorder %v131, %v132
    %v134 = vadd.s32 %v132, 32
    %vm135 = vcmp.lt.s32.totalorder %v131, %v134
    %vm136 = vmand %vm133, %vm135
    %v137 = vsel %vm136, 1, 0
    %v138 = vcvt.s32.f32 %v137
    %v139 = vmul.f32 %v120, 1.442695
    %v140 = vpow.pop %v139
    %v141 = vmul.f32 %v122, 1.442695
    %v142 = vpow.pop %v141
    %vm143 = vcmask 31744
    %v144 = vsel %vm143, %v140, 0.0
    %v145 = vrot.slane %v144, 4
    %v146 = vadd.f32 %v144, %v145
    %v147 = vrot.slane %v146, 2
    %v148 = vadd.f32 %v146, %v147
    %v149 = vrot.slane %v148, 1
    %v150 = vadd.f32 %v148, %v149
    %v151 = vsel %vm143, %v142, 0.0
    %v152 = vrot.slane %v151, 4
    %v153 = vadd.f32 %v151, %v152
    %v154 = vrot.slane %v153, 2
    %v155 = vadd.f32 %v153, %v154
    %v156 = vrot.slane %v155, 1
    %v157 = vadd.f32 %v155, %v156
    %v158 = vadd.f32 %v150, 1e-08
    %v159 = vadd.f32 %v157, 1e-08
    %v160 = vrcp.pop %v158
    %v161 = vrcp.pop %v159
    %v162 = vmul.f32 %v140, %v160
    %v163 = vmul.f32 %v142, %v161
    %v164 = vpack.c.bf16 %v162, %v162
    %v165 = vpack.c.bf16 %v163, %v163
    %166 = vxpose.xlu0.c.b16.start [1/8] %v164, 128
    %167 = vxpose.xlu0.c.b16.cont [2/8] 0, 128
    %168 = vxpose.xlu0.c.b16.cont [3/8] 0, 128
    %169 = vxpose.xlu0.c.b16.cont [4/8] 0, 128
    %170 = vxpose.xlu0.c.b16.cont [5/8] 0, 128
    %171 = vxpose.xlu0.c.b16.cont [6/8] 0, 128
    %172 = vxpose.xlu0.c.b16.cont [7/8] 0, 128
    %173 = vxpose.xlu0.c.b16.end [8/8] 0, 128
    %v174 = vpop.trf.xlu0
    %v175 = vpop.trf.xlu0
    %v176 = vpop.trf.xlu0
    %v177 = vpop.trf.xlu0
    %v178 = vpop.trf.xlu0
    %v179 = vpop.trf.xlu0
    %v180 = vpop.trf.xlu0
    %v181 = vpop.trf.xlu0
    %vm182 = vcmask 64512
    %v184 = vsel %vm182, %v174, 0
    %vm186 = vcmask 1043456
    %v188 = vsel %vm186, %v124, 0
    %190 = vmatpush.bf16.msra.mxu0 0
    %191 = vmatpush.bf16.msra.mxu0 0
    %192 = vmatpush.bf16.msra.mxu0 0
    %193 = vmatpush.bf16.msra.mxu0 0
    %194 = vmatpush.bf16.msra.mxu0 0
    %195 = vmatpush.bf16.msra.mxu0 0
    %196 = vmatpush.bf16.msra.mxu0 0
    %197 = vmatpush.bf16.msra.mxu0 %v188
    %198 = vmatmul.bf16.gmra.mxu0 %v184
    %v199 = vpop.f32.mrf.mxu0
    %v200 = vadd.f32 0.0, %v199
    %v201 = vpop.f32.mrf.mxu0
    %202 = vdwg.mxu0
    %203 = vxpose.xlu0.c.b16.start [1/8] %v165, 128
    %204 = vxpose.xlu0.c.b16.cont [2/8] 0, 128
    %205 = vxpose.xlu0.c.b16.cont [3/8] 0, 128
    %206 = vxpose.xlu0.c.b16.cont [4/8] 0, 128
    %207 = vxpose.xlu0.c.b16.cont [5/8] 0, 128
    %208 = vxpose.xlu0.c.b16.cont [6/8] 0, 128
    %209 = vxpose.xlu0.c.b16.cont [7/8] 0, 128
    %210 = vxpose.xlu0.c.b16.end [8/8] 0, 128
    %v211 = vpop.trf.xlu0
    %v212 = vpop.trf.xlu0
    %v213 = vpop.trf.xlu0
    %v214 = vpop.trf.xlu0
    %v215 = vpop.trf.xlu0
    %v216 = vpop.trf.xlu0
    %v217 = vpop.trf.xlu0
    %v218 = vpop.trf.xlu0
    %v220 = vsel %vm182, %v211, 0
    %v223 = vsel %vm186, %v125, 0
    %225 = vmatpush.bf16.msra.mxu0 0
    %226 = vmatpush.bf16.msra.mxu0 0
    %227 = vmatpush.bf16.msra.mxu0 0
    %228 = vmatpush.bf16.msra.mxu0 0
    %229 = vmatpush.bf16.msra.mxu0 0
    %230 = vmatpush.bf16.msra.mxu0 0
    %231 = vmatpush.bf16.msra.mxu0 0
    %232 = vmatpush.bf16.msra.mxu0 %v223
    %233 = vmatmul.bf16.gmra.mxu0 %v220
    %v234 = vpop.f32.mrf.mxu0
    %v235 = vadd.f32 0.0, %v234
    %v236 = vpop.f32.mrf.mxu0
    %237 = vdwg.mxu0
    %v238 = vmul.f32 %v200, %v138
    %v239 = vmul.f32 %v235, %v138
    %v240 = vsel %vm186, %v238, 0.0
    %v241 = vrot.slane %v240, 4
    %v242 = vadd.f32 %v240, %v241
    %v243 = vrot.slane %v242, 2
    %v244 = vadd.f32 %v242, %v243
    %v245 = vrot.slane %v244, 1
    %v246 = vadd.f32 %v244, %v245
    %v247 = vsel %vm186, %v239, 0.0
    %v248 = vrot.slane %v247, 4
    %v249 = vadd.f32 %v247, %v248
    %v250 = vrot.slane %v249, 2
    %v251 = vadd.f32 %v249, %v250
    %v252 = vrot.slane %v251, 1
    %v253 = vadd.f32 %v251, %v252
    %v254 = vpack.c.bf16 %v246, %v246
    %v255 = vpack.c.bf16 %v253, %v253
    %v256 = vunpack.c.l.bf16 %v126
    %v257 = vunpack.c.l.bf16 %v127
    %v258 = vunpack.c.l.bf16 %v254
    %v259 = vunpack.c.l.bf16 %v255
    %v260 = vmul.f32 %v256, %v258
    %v261 = vmul.f32 %v257, %v259
    %v262 = vpack.c.bf16 %v260, %v260
    %v263 = vpack.c.bf16 %v261, %v261
    %v264 = vld [vmem:[%s2] sm:$0xf]
    %v265 = vld [vmem:[%s2 + $0x4] sm:$0xf]
    %v266 = vld [vmem:[%s2 + $0x8] sm:$0xf]
    %v267 = vld [vmem:[%s2 + $0xc] sm:$0xf]
    %v268 = vld [vmem:[%s2 + $0x10] sm:$0xf]
    %v269 = vld [vmem:[%s2 + $0x14] sm:$0xf]
    %v270 = vld [vmem:[%s2 + $0x18] sm:$0xf]
    %v271 = vld [vmem:[%s2 + $0x1c] sm:$0xf]
    %v272 = vld [vmem:[%s2 + $0x20] sm:$0xf]
    %v273 = vld [vmem:[%s2 + $0x24] sm:$0xf]
    %v274 = vld [vmem:[%s2 + $0x28] sm:$0xf]
    %v275 = vld [vmem:[%s2 + $0x2c] sm:$0xf]
    %v276 = vld [vmem:[%s2 + $0x30] sm:$0xf]
    %v277 = vld [vmem:[%s2 + $0x34] sm:$0xf]
    %v278 = vld [vmem:[%s2 + $0x38] sm:$0xf]
    %v279 = vld [vmem:[%s2 + $0x3c] sm:$0xf]
    %v282 = vunpack.c.l.b16 %v262
    %v283 = vunpack.c.l.b16 %v263
    %v284 = vpack.c.b16 %v283, %v282
    %v302 = vunpack.c.l.b16 %v264
    %v303 = vunpack.c.l.b16 %v265
    %v304 = vunpack.c.l.b16 %v266
    %v305 = vunpack.c.l.b16 %v267
    %v306 = vunpack.c.l.b16 %v268
    %v307 = vunpack.c.l.b16 %v269
    %v308 = vunpack.c.l.b16 %v270
    %v309 = vunpack.c.l.b16 %v271
    %v310 = vunpack.c.l.b16 %v272
    %v311 = vunpack.c.l.b16 %v273
    %v312 = vunpack.c.l.b16 %v274
    %v313 = vunpack.c.l.b16 %v275
    %v314 = vunpack.c.l.b16 %v276
    %v315 = vunpack.c.l.b16 %v277
    %v316 = vunpack.c.l.b16 %v278
    %v317 = vunpack.c.l.b16 %v279
    %v318 = vpack.c.b16 %v303, %v302
    %v319 = vpack.c.b16 %v305, %v304
    %v320 = vpack.c.b16 %v307, %v306
    %v321 = vpack.c.b16 %v309, %v308
    %v322 = vpack.c.b16 %v311, %v310
    %v323 = vpack.c.b16 %v313, %v312
    %v324 = vpack.c.b16 %v315, %v314
    %v325 = vpack.c.b16 %v317, %v316
    %334 = vmatpush.bf16.msra.mxu0 %v325
    %335 = vmatpush.bf16.msra.mxu0 %v324
    %336 = vmatpush.bf16.msra.mxu0 %v323
    %337 = vmatpush.bf16.msra.mxu0 %v322
    %338 = vmatpush.bf16.msra.mxu0 %v321
    %339 = vmatpush.bf16.msra.mxu0 %v320
    %340 = vmatpush.bf16.msra.mxu0 %v319
    %341 = vmatpush.bf16.msra.mxu0 %v318
    %342 = vmatmul.bf16.gmra.mxu0 %v284
    %v343 = vpop.f32.mrf.mxu0
    %v344 = vadd.f32 0.0, %v343
    %v345 = vpop.f32.mrf.mxu0
    %v346 = vadd.f32 0.0, %v345
    %347 = vdwg.mxu0
    %v348 = vmul.f32 %v344, 1.442695
    %v349 = vpow.pop %v348
    %v350 = vmul.f32 %v346, 1.442695
    %v351 = vpow.pop %v350
    %v352 = vsel %vm143, %v349, 0.0
    %v353 = vrot.slane %v352, 4
    %v354 = vadd.f32 %v352, %v353
    %v355 = vrot.slane %v354, 2
    %v356 = vadd.f32 %v354, %v355
    %v357 = vrot.slane %v356, 1
    %v358 = vadd.f32 %v356, %v357
    %v359 = vsel %vm143, %v351, 0.0
    %v360 = vrot.slane %v359, 4
    %v361 = vadd.f32 %v359, %v360
    %v362 = vrot.slane %v361, 2
    %v363 = vadd.f32 %v361, %v362
    %v364 = vrot.slane %v363, 1
    %v365 = vadd.f32 %v363, %v364
    %v366 = vadd.f32 %v358, 1e-08
    %v367 = vadd.f32 %v365, 1e-08
    %v368 = vrcp.pop %v366
    %v369 = vrcp.pop %v367
    %v370 = vmul.f32 %v349, %v368
    %v371 = vmul.f32 %v351, %v369
    %v372 = vpack.c.bf16 %v370, %v370
    %v373 = vpack.c.bf16 %v371, %v371
    %374 = vxpose.xlu0.c.b16.start [1/8] %v372, 128
    %375 = vxpose.xlu0.c.b16.cont [2/8] 0, 128
    %376 = vxpose.xlu0.c.b16.cont [3/8] 0, 128
    %377 = vxpose.xlu0.c.b16.cont [4/8] 0, 128
    %378 = vxpose.xlu0.c.b16.cont [5/8] 0, 128
    %379 = vxpose.xlu0.c.b16.cont [6/8] 0, 128
    %380 = vxpose.xlu0.c.b16.cont [7/8] 0, 128
    %381 = vxpose.xlu0.c.b16.end [8/8] 0, 128
    %v382 = vpop.trf.xlu0
    %v383 = vpop.trf.xlu0
    %v384 = vpop.trf.xlu0
    %v385 = vpop.trf.xlu0
    %v386 = vpop.trf.xlu0
    %v387 = vpop.trf.xlu0
    %v388 = vpop.trf.xlu0
    %v389 = vpop.trf.xlu0
    %v391 = vsel %vm182, %v382, 0
    %v394 = vsel %vm186, %v262, 0
    %396 = vmatpush.bf16.msra.mxu0 0
    %397 = vmatpush.bf16.msra.mxu0 0
    %398 = vmatpush.bf16.msra.mxu0 0
    %399 = vmatpush.bf16.msra.mxu0 0
    %400 = vmatpush.bf16.msra.mxu0 0
    %401 = vmatpush.bf16.msra.mxu0 0
    %402 = vmatpush.bf16.msra.mxu0 0
    %403 = vmatpush.bf16.msra.mxu0 %v394
    %404 = vmatmul.bf16.gmra.mxu0 %v391
    %v405 = vpop.f32.mrf.mxu0
    %v406 = vadd.f32 0.0, %v405
    %v407 = vpop.f32.mrf.mxu0
    %408 = vdwg.mxu0
    %409 = vxpose.xlu0.c.b16.start [1/8] %v373, 128
    %410 = vxpose.xlu0.c.b16.cont [2/8] 0, 128
    %411 = vxpose.xlu0.c.b16.cont [3/8] 0, 128
    %412 = vxpose.xlu0.c.b16.cont [4/8] 0, 128
    %413 = vxpose.xlu0.c.b16.cont [5/8] 0, 128
    %414 = vxpose.xlu0.c.b16.cont [6/8] 0, 128
    %415 = vxpose.xlu0.c.b16.cont [7/8] 0, 128
    %416 = vxpose.xlu0.c.b16.end [8/8] 0, 128
    %v417 = vpop.trf.xlu0
    %v418 = vpop.trf.xlu0
    %v419 = vpop.trf.xlu0
    %v420 = vpop.trf.xlu0
    %v421 = vpop.trf.xlu0
    %v422 = vpop.trf.xlu0
    %v423 = vpop.trf.xlu0
    %v424 = vpop.trf.xlu0
    %v426 = vsel %vm182, %v417, 0
    %v429 = vsel %vm186, %v263, 0
    %431 = vmatpush.bf16.msra.mxu0 0
    %432 = vmatpush.bf16.msra.mxu0 0
    %433 = vmatpush.bf16.msra.mxu0 0
    %434 = vmatpush.bf16.msra.mxu0 0
    %435 = vmatpush.bf16.msra.mxu0 0
    %436 = vmatpush.bf16.msra.mxu0 0
    %437 = vmatpush.bf16.msra.mxu0 0
    %438 = vmatpush.bf16.msra.mxu0 %v429
    %439 = vmatmul.bf16.gmra.mxu0 %v426
    %v440 = vpop.f32.mrf.mxu0
    %v441 = vadd.f32 0.0, %v440
    %v442 = vpop.f32.mrf.mxu0
    %443 = vdwg.mxu0
    %v444 = vmul.f32 %v406, %v138
    %v445 = vmul.f32 %v441, %v138
    %v446 = vsel %vm186, %v444, 0.0
    %v447 = vrot.slane %v446, 4
    %v448 = vadd.f32 %v446, %v447
    %v449 = vrot.slane %v448, 2
    %v450 = vadd.f32 %v448, %v449
    %v451 = vrot.slane %v450, 1
    %v452 = vadd.f32 %v450, %v451
    %v453 = vsel %vm186, %v445, 0.0
    %v454 = vrot.slane %v453, 4
    %v455 = vadd.f32 %v453, %v454
    %v456 = vrot.slane %v455, 2
    %v457 = vadd.f32 %v455, %v456
    %v458 = vrot.slane %v457, 1
    %v459 = vadd.f32 %v457, %v458
    %v460 = vpack.c.bf16 %v452, %v452
    %v461 = vpack.c.bf16 %v459, %v459
    %v462 = vunpack.c.l.bf16 %v124
    %v463 = vunpack.c.l.bf16 %v125
    %v464 = vunpack.c.l.bf16 %v460
    %v465 = vunpack.c.l.bf16 %v461
    %v466 = vmul.f32 %v462, %v464
    %v467 = vmul.f32 %v463, %v465
    %v468 = vpack.c.bf16 %v466, %v466
    %v469 = vpack.c.bf16 %v467, %v467
    %v470 = vld [vmem:[%s3] sm:$0xf]
    %v471 = vld [vmem:[%s3 + $0x4] sm:$0xf]
    %v472 = vld [vmem:[%s3 + $0x8] sm:$0xf]
    %v473 = vld [vmem:[%s3 + $0xc] sm:$0xf]
    %v474 = vld [vmem:[%s3 + $0x10] sm:$0xf]
    %v475 = vld [vmem:[%s3 + $0x14] sm:$0xf]
    %v476 = vld [vmem:[%s3 + $0x18] sm:$0xf]
    %v477 = vld [vmem:[%s3 + $0x1c] sm:$0xf]
    %v478 = vld [vmem:[%s3 + $0x20] sm:$0xf]
    %v479 = vld [vmem:[%s3 + $0x24] sm:$0xf]
    %v480 = vld [vmem:[%s3 + $0x28] sm:$0xf]
    %v481 = vld [vmem:[%s3 + $0x2c] sm:$0xf]
    %v482 = vld [vmem:[%s3 + $0x30] sm:$0xf]
    %v483 = vld [vmem:[%s3 + $0x34] sm:$0xf]
    %v484 = vld [vmem:[%s3 + $0x38] sm:$0xf]
    %v485 = vld [vmem:[%s3 + $0x3c] sm:$0xf]
    %v488 = vunpack.c.l.b16 %v468
    %v489 = vunpack.c.l.b16 %v469
    %v490 = vpack.c.b16 %v489, %v488
    %v508 = vunpack.c.l.b16 %v470
    %v509 = vunpack.c.l.b16 %v471
    %v510 = vunpack.c.l.b16 %v472
    %v511 = vunpack.c.l.b16 %v473
    %v512 = vunpack.c.l.b16 %v474
    %v513 = vunpack.c.l.b16 %v475
    %v514 = vunpack.c.l.b16 %v476
    %v515 = vunpack.c.l.b16 %v477
    %v516 = vunpack.c.l.b16 %v478
    %v517 = vunpack.c.l.b16 %v479
    %v518 = vunpack.c.l.b16 %v480
    %v519 = vunpack.c.l.b16 %v481
    %v520 = vunpack.c.l.b16 %v482
    %v521 = vunpack.c.l.b16 %v483
    %v522 = vunpack.c.l.b16 %v484
    %v523 = vunpack.c.l.b16 %v485
    %v524 = vpack.c.b16 %v509, %v508
    %v525 = vpack.c.b16 %v511, %v510
    %v526 = vpack.c.b16 %v513, %v512
    %v527 = vpack.c.b16 %v515, %v514
    %v528 = vpack.c.b16 %v517, %v516
    %v529 = vpack.c.b16 %v519, %v518
    %v530 = vpack.c.b16 %v521, %v520
    %v531 = vpack.c.b16 %v523, %v522
    %540 = vmatpush.bf16.msra.mxu0 %v531
    %541 = vmatpush.bf16.msra.mxu0 %v530
    %542 = vmatpush.bf16.msra.mxu0 %v529
    %543 = vmatpush.bf16.msra.mxu0 %v528
    %544 = vmatpush.bf16.msra.mxu0 %v527
    %545 = vmatpush.bf16.msra.mxu0 %v526
    %546 = vmatpush.bf16.msra.mxu0 %v525
    %547 = vmatpush.bf16.msra.mxu0 %v524
    %548 = vmatmul.bf16.gmra.mxu0 %v490
    %v549 = vpop.f32.mrf.mxu0
    %v550 = vadd.f32 0.0, %v549
    %v551 = vpop.f32.mrf.mxu0
    %v552 = vadd.f32 0.0, %v551
    %553 = vdwg.mxu0
    %v554 = vadd.f32 %v92, %v550
    %v555 = vadd.f32 %v94, %v552
    %556 = vst [vmem:[#allocation7] sm:$0xff] %v554
    %557 = vst [vmem:[#allocation7 + $0x8] sm:$0xff] %v555
    // Predicated region
    $region26: #{tpu_custom_call.1} parent=1 // pred_check
      _
    $region27: #{tpu_custom_call.1} parent=1 // pred_check_branch
      %559 = sbr.rel (0) target = $region29
    $region28: #{tpu_custom_call.1} parent=1 // pred_region
      %561 = vsyncadd [#allocation4], 0
      %s562 = sshll.u32 [#allocation7], 4
      %s563 = int_to_ptr.vmem [resolvable:$true] %s562
      %s564 = sshll.u32 %s4, 4
      %s565 = int_to_ptr.hbm [resolvable:$true] %s564
      %570 = dma.vmem_to_hbm [thread:$0]  %s563, 256, %s565, [#allocation4], 128, 128, 8
    $region29: #{tpu_custom_call.1} parent=1 // pred_fallthru
      _
    // Predicated region
    $region30: #{tpu_custom_call.1} parent=1 // pred_check
      _
    $region31: #{tpu_custom_call.1} parent=1 // pred_check_branch
      %572 = sbr.rel (0) target = $region33
    $region32: #{tpu_custom_call.1} parent=1 // pred_region
      %574 = dma.done [#allocation4], 256
    $region33: #{tpu_custom_call.1} parent=1 // pred_fallthru
      _
    %575 = vsyncpa [#allocation3], 1
    %576 = vsyncpa [#allocation6], 1
    %577 = vsyncpa [#allocation4], 1

</llo_original>
